<compile_context>
chip_gen: v7x
topology: tpu7x:2x2x1
jax: 0.10.0
libtpu: 0.0.40
codegen_flags: <defaults>
</compile_context>

<pallas_src>
import functools

import jax
import jax.numpy as jnp
from jax.experimental import pallas as pl
from jax.experimental.pallas import tpu as pltpu


def _simam_kernel(x_ref, o_ref, *, n_inv, e_lambda):
    # x_ref / o_ref: (TR, HW) VMEM tiles; each row is one (b, c) channel.
    x = x_ref[...].astype(jnp.float32)

    mu = jnp.mean(x, axis=-1, keepdims=True)            # (TR, 1)
    d = x - mu
    d2 = d * d
    s = jnp.sum(d2, axis=-1, keepdims=True)             # (TR, 1)

    denom = 4.0 * (s * jnp.float32(n_inv) + jnp.float32(e_lambda))
    y = d2 / denom + jnp.float32(0.5)
    out = x * jax.nn.sigmoid(y)

    o_ref[...] = out.astype(o_ref.dtype)


def simam_pallas(x, e_lambda: float = 1e-4):
    """SimAM forward. x: (B, C, H, W)."""
    B, C, H, W = x.shape
    HW = H * W
    R = B * C
    n = HW - 1

    x2 = x.reshape(R, HW)

    # Row-block size: full R if small; otherwise a multiple of 8 capped so a
    # single block stays around <= 4 MiB (v7x VMEM headroom, depth-2 pipeline).
    target_block_bytes = 4 * 1024 * 1024
    bytes_per_row = HW * x.dtype.itemsize
    if R <= 8:
        tr = R
    else:
        tr = max(8, min(R, (target_block_bytes // max(bytes_per_row, 1)) // 8 * 8))
        if tr >= R:
            tr = R

    grid_r = pl.cdiv(R, tr)

    kernel = functools.partial(_simam_kernel, n_inv=1.0 / float(n), e_lambda=float(e_lambda))

    out2 = pl.pallas_call(
        kernel,
        out_shape=jax.ShapeDtypeStruct((R, HW), x.dtype),
        grid_spec=pltpu.PrefetchScalarGridSpec(
            num_scalar_prefetch=0,
            grid=(grid_r,),
            in_specs=[pl.BlockSpec((tr, HW), lambda r: (r, 0))],
            out_specs=pl.BlockSpec((tr, HW), lambda r: (r, 0)),
        ),
        compiler_params=pltpu.CompilerParams(
            dimension_semantics=("parallel",),  # independent row blocks -> megacore-friendly
        ),
    )(x2)

    return out2.reshape(B, C, H, W)


def simam_ref(x, e_lambda: float = 1e-4):
    """Pure-JAX reference matching the PyTorch SimAM forward."""
    b, c, h, w = x.shape
    n = h * w - 1
    mu = x.mean(axis=(2, 3), keepdims=True)
    d2 = (x - mu) ** 2
    y = d2 / (4.0 * (d2.sum(axis=(2, 3), keepdims=True) / n + e_lambda)) + 0.5
    return x * jax.nn.sigmoid(y)


if __name__ == "__main__":
    key = jax.random.PRNGKey(0)
    B, C, H, W = 2, 4, 16, 16
    x = jax.random.normal(key, (B, C, H, W), dtype=jnp.float32)

    e_lambda = 1e-4
    y = simam_pallas(x, e_lambda=e_lambda)
    y = jax.block_until_ready(y)

    y_ref = simam_ref(x, e_lambda=e_lambda)
    assert y.shape == x.shape
    assert jnp.allclose(y, y_ref, rtol=1e-5, atol=1e-5), (
        f"max abs err {float(jnp.max(jnp.abs(y - y_ref)))}"
    )

    print("KERNEL_OK")
</pallas_src>

<mosaic_0001>
module attributes {stable_mosaic.version = 11 : i64} {
  func.func @_simam_kernel(%arg0: i32, %arg1: memref<8x256xf32, #tpu.memory_space<vmem>>, %arg2: memref<8x256xf32, #tpu.memory_space<vmem>>) attributes {dimension_semantics = [#tpu.dimension_semantics<parallel>], iteration_bounds = array<i64: 1>, scalar_prefetch = 0 : i64, scratch_operands = 0 : i64, tpu.core_type = #tpu.core_type<tc>, window_params = [{transform_indices = @transform_0, window_bounds = array<i64: 8, 256>}, {transform_indices = @transform_1, window_bounds = array<i64: 8, 256>}]} {
    %c0 = arith.constant 0 : index
    %c0_0 = arith.constant 0 : index
    %0 = vector.load %arg1[%c0, %c0_0] : memref<8x256xf32, #tpu.memory_space<vmem>>, vector<8x256xf32>
    %cst = arith.constant dense<0.000000e+00> : vector<8xf32>
    %1 = vector.multi_reduction <add>, %0, %cst [1] : vector<8x256xf32> to vector<8xf32>
    %2 = vector.shape_cast %1 : vector<8xf32> to vector<8x1xf32>
    %cst_1 = arith.constant 2.560000e+02 : f32
    %3 = vector.broadcast %cst_1 : f32 to vector<8x1xf32>
    %4 = arith.divf %2, %3 : vector<8x1xf32>
    %5 = vector.broadcast %4 : vector<8x1xf32> to vector<8x256xf32>
    %6 = arith.subf %0, %5 : vector<8x256xf32>
    %7 = arith.mulf %6, %6 : vector<8x256xf32>
    %cst_2 = arith.constant dense<0.000000e+00> : vector<8xf32>
    %8 = vector.multi_reduction <add>, %7, %cst_2 [1] : vector<8x256xf32> to vector<8xf32>
    %9 = vector.shape_cast %8 : vector<8xf32> to vector<8x1xf32>
    %cst_3 = arith.constant 0.00392156886 : f32
    %10 = vector.broadcast %cst_3 : f32 to vector<8x1xf32>
    %11 = arith.mulf %9, %10 : vector<8x1xf32>
    %cst_4 = arith.constant 9.99999974E-5 : f32
    %12 = vector.broadcast %cst_4 : f32 to vector<8x1xf32>
    %13 = arith.addf %11, %12 : vector<8x1xf32>
    %cst_5 = arith.constant 4.000000e+00 : f32
    %14 = vector.broadcast %cst_5 : f32 to vector<8x1xf32>
    %15 = arith.mulf %14, %13 : vector<8x1xf32>
    %16 = vector.broadcast %15 : vector<8x1xf32> to vector<8x256xf32>
    %17 = arith.divf %7, %16 : vector<8x256xf32>
    %cst_6 = arith.constant 5.000000e-01 : f32
    %18 = vector.broadcast %cst_6 : f32 to vector<8x256xf32>
    %19 = arith.addf %17, %18 : vector<8x256xf32>
    %20 = arith.negf %19 : vector<8x256xf32>
    %21 = math.exp %20 : vector<8x256xf32>
    %cst_7 = arith.constant 1.000000e+00 : f32
    %22 = vector.broadcast %cst_7 : f32 to vector<8x256xf32>
    %23 = arith.addf %22, %21 : vector<8x256xf32>
    %24 = arith.divf %22, %23 : vector<8x256xf32>
    %25 = arith.mulf %0, %24 : vector<8x256xf32>
    %c0_8 = arith.constant 0 : index
    %c0_9 = arith.constant 0 : index
    %26 = vector.load %arg2[%c0_8, %c0_9] : memref<8x256xf32, #tpu.memory_space<vmem>>, vector<8x256xf32>
    tpu.vector_store %arg2[%c0_8, %c0_9], %25 {strides = array<i32>} : memref<8x256xf32, #tpu.memory_space<vmem>>, vector<8x256xf32>,
    return
  }
  func.func @transform_0(%arg0: i32) -> (i32, i32) {
    %c0_i32 = arith.constant 0 : i32
    %c0_i32_0 = arith.constant 0 : i32
    return %arg0, %c0_i32 : i32, i32
  }
  func.func @transform_1(%arg0: i32) -> (i32, i32) {
    %c0_i32 = arith.constant 0 : i32
    %c0_i32_0 = arith.constant 0 : i32
    return %arg0, %c0_i32 : i32, i32
  }
}

</mosaic_0001>

<llo_original>
// kernel: tpu_custom_call.1
$region0: #{tpu_custom_call.1}
  #allocation0 [shape = 'u32[]', space=smem, size = 0x4, offset = 0x4, fixed_abs, tag = 'smem constant byte address 0x4 - core index']
  #allocation1 [shape = 'u32[144,128]{1,0:T(1,128)}', space=vmem, size = 0x12000, scoped, tag = 'internal scratch']
  %s0 = inlined_call_operand.hbm [shape: f32[8,256], index: 0, kind: input, shape index: {}]
  %s1 = inlined_call_operand.hbm [shape: f32[8,256], index: 1, kind: output, shape index: {}]
  %s2 = sld [smem:[#allocation0]]
  $region18: #{tpu_custom_call.1} parent=0
    _
  %s4 = ssub.s32 1, %s2
  %s5 = scalar_select 0, %s4, %s2
  $region1: #{tpu_custom_call.1} parent=0
    #allocation2 [shape = 'u8[8192]{0}', space=vmem, size = 0x2000, scoped, tag = 'input window, operand 0, single buffered']
    #allocation3 [shape = 's32[1]{0}', space=sflag, size = 0x4, scoped, tag = 'scoped memory for tpu_custom_call.1']
    #allocation4 [shape = 's32[1]{0}', space=sflag, size = 0x4, scoped, tag = 'scoped memory for tpu_custom_call.1']
    #allocation5 [shape = 'u8[8192]{0}', space=vmem, size = 0x2000, scoped, tag = 'output window, operand 0, single buffered']
    %6 = vsyncpa [#allocation3], 0
    %7 = vsyncpa [#allocation4], 0
    // Predicated region
    $region2: #{tpu_custom_call.1} parent=1 // pred_check
      _
    $region3: #{tpu_custom_call.1} parent=1 // pred_check_branch
      %9 = sbr.rel (0) target = $region5
    $region4: #{tpu_custom_call.1} parent=1 // pred_region
      %s11 = ssub.s32 256, 256
      %12 = vsyncadd [#allocation3], %s11
      %s14 = sshll.u32 [#allocation2], 4
      %s15 = int_to_ptr.vmem [resolvable:$true] %s14
      %17 = dma.hbm_to_vmem [thread:$0]  %s0, 256, %s15, [#allocation3]
    $region5: #{tpu_custom_call.1} parent=1 // pred_fallthru
      _
    // Predicated region
    $region6: #{tpu_custom_call.1} parent=1 // pred_check
      _
    $region7: #{tpu_custom_call.1} parent=1 // pred_check_branch
      %19 = sbr.rel (0) target = $region9
    $region8: #{tpu_custom_call.1} parent=1 // pred_region
      %20 = dma.done [#allocation3], 256
    $region9: #{tpu_custom_call.1} parent=1 // pred_fallthru
      _
    %v21 = vld [vmem:[#allocation2] sm:$0xff]
    %v22 = vld [vmem:[#allocation2 + $0x8] sm:$0xff]
    %v23 = vadd.f32 %v21, %v22
    %24 = vadd.xlane.f32.xlu0 %v23
    %v25 = vpop.xlane.xlu0 %24
    %v26 = vrcp.pop 256.0
    %v27 = vmul.f32 %v25, %v26
    %v28 = vsub.f32 %v21, %v27
    %v29 = vsub.f32 %v22, %v27
    %v30 = vmul.f32 %v28, %v28
    %v31 = vmul.f32 %v29, %v29
    %v32 = vadd.f32 %v30, %v31
    %33 = vadd.xlane.f32.xlu0 %v32
    %v34 = vpop.xlane.xlu0 %33
    %v35 = vmul.f32 %v34, 0.003921569
    %v36 = vadd.f32 %v35, 0.0001
    %v37 = vmul.f32 %v36, 4.0
    %v38 = vrcp.pop %v37
    %v39 = vmul.f32 %v30, %v38
    %v40 = vmul.f32 %v31, %v38
    %v41 = vadd.f32 %v39, 0.5
    %v42 = vadd.f32 %v40, 0.5
    %v43 = vxor.u32 %v41, 2147483648
    %v44 = vxor.u32 %v42, 2147483648
    %v45 = vmul.f32 %v43, 1.442695
    %v46 = vpow.pop %v45
    %v47 = vmul.f32 %v44, 1.442695
    %v48 = vpow.pop %v47
    %v49 = vadd.f32 %v46, 1.0
    %v50 = vadd.f32 %v48, 1.0
    %v51 = vrcp.pop %v49
    %v52 = vmul.f32 1.0, %v51
    %v53 = vrcp.pop %v50
    %v54 = vmul.f32 1.0, %v53
    %v55 = vmul.f32 %v21, %v52
    %v56 = vmul.f32 %v22, %v54
    %57 = vst [vmem:[#allocation5] sm:$0xff] %v55
    %58 = vst [vmem:[#allocation5 + $0x8] sm:$0xff] %v56
    // Predicated region
    $region10: #{tpu_custom_call.1} parent=1 // pred_check
      _
    $region11: #{tpu_custom_call.1} parent=1 // pred_check_branch
      %60 = sbr.rel (0) target = $region13
    $region12: #{tpu_custom_call.1} parent=1 // pred_region
      %s62 = ssub.s32 256, 256
      %63 = vsyncadd [#allocation4], %s62
      %s65 = sshll.u32 [#allocation5], 4
      %s66 = int_to_ptr.vmem [resolvable:$true] %s65
      %68 = dma.vmem_to_hbm [thread:$0]  %s66, 256, %s1, [#allocation4]
    $region13: #{tpu_custom_call.1} parent=1 // pred_fallthru
      _
    // Predicated region
    $region14: #{tpu_custom_call.1} parent=1 // pred_check
      _
    $region15: #{tpu_custom_call.1} parent=1 // pred_check_branch
      %70 = sbr.rel (0) target = $region17
    $region16: #{tpu_custom_call.1} parent=1 // pred_region
      %71 = dma.done [#allocation4], 256
    $region17: #{tpu_custom_call.1} parent=1 // pred_fallthru
      _
    %72 = vsyncpa [#allocation3], 1
    %73 = vsyncpa [#allocation4], 1

</llo_original>
